<compile_context>
chip_gen: v5e
topology: v5e:2x2
jax: 0.10.0
libtpu: 0.0.40
codegen_flags: <defaults>
</compile_context>

<pallas_src>
import jax
import jax.numpy as jnp
from jax.experimental import pallas as pl
from jax.experimental.pallas import tpu as pltpu

HIDDEN = 128


def _value_net_kernel(x_ref, w1_ref, b1_ref, w2_ref, b2_ref, o_ref):
    # fc1 on the MXU with f32 accumulation; bias + ReLU on the VPU.
    h = jnp.dot(x_ref[...], w1_ref[...], preferred_element_type=jnp.float32)
    h = jnp.maximum(h + b1_ref[...], 0.0)
    # fc2 (128 -> 1) as VPU multiply + cross-lane reduction (w2 as a (1, 128)
    # broadcast row); avoids a second MXU round-trip that would use 1 column.
    out = jnp.sum(h * w2_ref[...], axis=-1, keepdims=True) + b2_ref[0, 0]
    o_ref[...] = out.astype(o_ref.dtype)


def _choose_tile(batch, max_tile):
    """Pick (tile, padded_batch): tile is a multiple of 8 and divides padded_batch.

    Prefers a tile that divides the sublane-aligned batch so no HBM pad-copy of
    x is needed; falls back to padding to a multiple of max_tile otherwise.
    """
    padded8 = pl.cdiv(batch, 8) * 8                       # sublane-align
    max_tile = max(8, min(max_tile - max_tile % 8, padded8))
    t = max_tile
    while t >= 128:                                       # avoid tiny tiles
        if padded8 % t == 0:
            return t, padded8                             # no pad copy needed
        t -= 8
    return max_tile, pl.cdiv(padded8, max_tile) * max_tile  # pad fallback


def value_net_forward(x, w1, b1, w2, b2, *, tile_b=512):
    """x: (..., state_dim) f32. Returns (..., 1) f32 (like nn.Linear over last dim)."""
    state_dim = x.shape[-1]
    lead = x.shape[:-1]
    x2 = x.reshape(-1, state_dim)
    batch = x2.shape[0]

    tile, padded = _choose_tile(batch, tile_b)
    if padded != batch:
        x2 = jnp.pad(x2, ((0, padded - batch), (0, 0)))

    w2_row = w2.reshape(1, HIDDEN)    # (128, 1) -> (1, 128) for in-kernel reduction
    b1_row = b1.reshape(1, HIDDEN)
    b2_s = b2.reshape(1, 1)

    grid = (padded // tile,)
    cost = pl.CostEstimate(
        flops=2 * padded * state_dim * HIDDEN + 3 * padded * HIDDEN,
        transcendentals=0,
        bytes_accessed=4 * (padded * state_dim            # x
                            + state_dim * HIDDEN          # w1 (resident)
                            + 2 * HIDDEN + 1              # b1, w2, b2
                            + padded),                    # out
    )

    out = pl.pallas_call(
        _value_net_kernel,
        out_shape=jax.ShapeDtypeStruct((padded, 1), jnp.float32),
        grid=grid,
        in_specs=[
            # Streamed over the batch grid axis (double-buffered by Pallas).
            pl.BlockSpec((tile, state_dim), lambda i: (i, 0)),
            # Weights / biases: constant index_map -> VMEM-resident.
            pl.BlockSpec((state_dim, HIDDEN), lambda i: (0, 0)),
            pl.BlockSpec((1, HIDDEN), lambda i: (0, 0)),
            pl.BlockSpec((1, HIDDEN), lambda i: (0, 0)),
            # b2 as an SMEM scalar (no padded VMEM tile, no per-step DMA).
            pl.BlockSpec(memory_space=pltpu.MemorySpace.SMEM),
        ],
        out_specs=pl.BlockSpec((tile, 1), lambda i: (i, 0)),
        compiler_params=pltpu.CompilerParams(
            dimension_semantics=("parallel",),
        ),
        cost_estimate=cost,
    )(x2, w1, b1_row, w2_row, b2_s)

    return out[:batch].reshape(*lead, 1)


def init_params(key, state_dim):
    """Deterministic init matching PyTorch nn.Linear shapes (stored transposed)."""
    k1, k2, k3, k4 = jax.random.split(key, 4)
    bound1 = 1.0 / jnp.sqrt(state_dim)
    bound2 = 1.0 / jnp.sqrt(HIDDEN)
    # PyTorch Linear: weight (out, in), bias (out,). Stored here as (in, out)
    # and (1, out) so the kernel uses plain x @ W.
    w1 = jax.random.uniform(k1, (state_dim, HIDDEN), jnp.float32, -bound1, bound1)
    b1 = jax.random.uniform(k2, (1, HIDDEN), jnp.float32, -bound1, bound1)
    w2 = jax.random.uniform(k3, (HIDDEN, 1), jnp.float32, -bound2, bound2)
    b2 = jax.random.uniform(k4, (1, 1), jnp.float32, -bound2, bound2)
    return w1, b1, w2, b2


if __name__ == "__main__":
    batch, state_dim = 8, 32
    key = jax.random.PRNGKey(0)
    kx, kp = jax.random.split(key)
    x = jax.random.normal(kx, (batch, state_dim), jnp.float32)
    w1, b1, w2, b2 = init_params(kp, state_dim)

    fwd = jax.jit(value_net_forward)

    out = jax.block_until_ready(fwd(x, w1, b1, w2, b2))
    ref = jnp.maximum(x @ w1 + b1, 0.0) @ w2 + b2
    assert out.shape == (batch, 1)
    assert jnp.allclose(out, ref, atol=1e-5, rtol=1e-5)

    # Larger, non-tile-multiple batch to exercise the divisor-tiling path
    # (1000 = 5 x 200 -> no pad copy of x).
    big_b = 1000
    xb = jax.random.normal(kx, (big_b, state_dim), jnp.float32)
    outb = jax.block_until_ready(fwd(xb, w1, b1, w2, b2))
    refb = jnp.maximum(xb @ w1 + b1, 0.0) @ w2 + b2
    assert outb.shape == (big_b, 1)
    assert jnp.allclose(outb, refb, atol=1e-5, rtol=1e-5)

    print("KERNEL_OK")
</pallas_src>

<mosaic_0001>
module attributes {stable_mosaic.version = 11 : i64} {
  func.func @_value_net_kernel(%arg0: i32, %arg1: memref<8x32xf32, #tpu.memory_space<vmem>>, %arg2: memref<32x128xf32, #tpu.memory_space<vmem>>, %arg3: memref<1x128xf32, #tpu.memory_space<vmem>>, %arg4: memref<1x128xf32, #tpu.memory_space<vmem>>, %arg5: memref<1x1xf32, #tpu.memory_space<smem>>, %arg6: memref<8x1xf32, #tpu.memory_space<vmem>>) attributes {dimension_semantics = [#tpu.dimension_semantics<parallel>], iteration_bounds = array<i64: 1>, scalar_prefetch = 0 : i64, scratch_operands = 0 : i64, tpu.core_type = #tpu.core_type<tc>, window_params = [{transform_indices = @transform_0, window_bounds = array<i64: 8, 32>}, {pipeline_mode = #tpu.pipeline_mode<synchronous>, transform_indices = @transform_1, window_bounds = array<i64: 32, 128>}, {pipeline_mode = #tpu.pipeline_mode<synchronous>, transform_indices = @transform_2, window_bounds = array<i64: 1, 128>}, {pipeline_mode = #tpu.pipeline_mode<synchronous>, transform_indices = @transform_3, window_bounds = array<i64: 1, 128>}, {transform_indices = @transform_4, window_bounds = array<i64: 1, 1>}, {transform_indices = @transform_5, window_bounds = array<i64: 8, 1>}]} {
    %c0 = arith.constant 0 : index
    %c0_0 = arith.constant 0 : index
    %0 = vector.load %arg1[%c0, %c0_0] : memref<8x32xf32, #tpu.memory_space<vmem>>, vector<8x32xf32>
    %c0_1 = arith.constant 0 : index
    %c0_2 = arith.constant 0 : index
    %1 = vector.load %arg2[%c0_1, %c0_2] : memref<32x128xf32, #tpu.memory_space<vmem>>, vector<32x128xf32>
    %cst = arith.constant dense<0.000000e+00> : vector<8x128xf32>
    %2 = tpu.matmul %0, %1, %cst {dimension_numbers = #tpu.dot_dimension_numbers<[1], [0], [0], [1], [0, 0, 1, 1], [], []>} : vector<8x32xf32>, vector<32x128xf32>, vector<8x128xf32> -> vector<8x128xf32>
    %c0_3 = arith.constant 0 : index
    %c0_4 = arith.constant 0 : index
    %3 = vector.load %arg3[%c0_3, %c0_4] : memref<1x128xf32, #tpu.memory_space<vmem>>, vector<1x128xf32>
    %4 = vector.broadcast %3 : vector<1x128xf32> to vector<8x128xf32>
    %5 = arith.addf %2, %4 : vector<8x128xf32>
    %cst_5 = arith.constant 0.000000e+00 : f32
    %6 = vector.broadcast %cst_5 : f32 to vector<8x128xf32>
    %7 = arith.maximumf %5, %6 : vector<8x128xf32>
    %c0_6 = arith.constant 0 : index
    %c0_7 = arith.constant 0 : index
    %8 = vector.load %arg4[%c0_6, %c0_7] : memref<1x128xf32, #tpu.memory_space<vmem>>, vector<1x128xf32>
    %9 = vector.broadcast %8 : vector<1x128xf32> to vector<8x128xf32>
    %10 = arith.mulf %7, %9 : vector<8x128xf32>
    %cst_8 = arith.constant dense<0.000000e+00> : vector<8xf32>
    %11 = vector.multi_reduction <add>, %10, %cst_8 [1] : vector<8x128xf32> to vector<8xf32>
    %12 = vector.shape_cast %11 : vector<8xf32> to vector<8x1xf32>
    %c0_9 = arith.constant 0 : index
    %c0_10 = arith.constant 0 : index
    %13 = memref.load %arg5[%c0_9, %c0_10] : memref<1x1xf32, #tpu.memory_space<smem>>
    %14 = vector.broadcast %13 : f32 to vector<8x1xf32>
    %15 = arith.addf %12, %14 : vector<8x1xf32>
    %c0_11 = arith.constant 0 : index
    %c0_12 = arith.constant 0 : index
    %16 = vector.load %arg6[%c0_11, %c0_12] : memref<8x1xf32, #tpu.memory_space<vmem>>, vector<8x1xf32>
    tpu.vector_store %arg6[%c0_11, %c0_12], %15 {strides = array<i32>} : memref<8x1xf32, #tpu.memory_space<vmem>>, vector<8x1xf32>,
    return
  }
  func.func @transform_0(%arg0: i32) -> (i32, i32) {
    %c0_i32 = arith.constant 0 : i32
    %c0_i32_0 = arith.constant 0 : i32
    return %arg0, %c0_i32 : i32, i32
  }
  func.func @transform_1(%arg0: i32) -> (i32, i32) {
    %c0_i32 = arith.constant 0 : i32
    %c0_i32_0 = arith.constant 0 : i32
    %c0_i32_1 = arith.constant 0 : i32
    return %c0_i32, %c0_i32_0 : i32, i32
  }
  func.func @transform_2(%arg0: i32) -> (i32, i32) {
    %c0_i32 = arith.constant 0 : i32
    %c0_i32_0 = arith.constant 0 : i32
    %c0_i32_1 = arith.constant 0 : i32
    return %c0_i32, %c0_i32_0 : i32, i32
  }
  func.func @transform_3(%arg0: i32) -> (i32, i32) {
    %c0_i32 = arith.constant 0 : i32
    %c0_i32_0 = arith.constant 0 : i32
    %c0_i32_1 = arith.constant 0 : i32
    return %c0_i32, %c0_i32_0 : i32, i32
  }
  func.func @transform_4(%arg0: i32) -> (i32, i32) {
    %c0_i32 = arith.constant 0 : i32
    %c0_i32_0 = arith.constant 0 : i32
    %c0_i32_1 = arith.constant 0 : i32
    return %c0_i32, %c0_i32_0 : i32, i32
  }
  func.func @transform_5(%arg0: i32) -> (i32, i32) {
    %c0_i32 = arith.constant 0 : i32
    %c0_i32_0 = arith.constant 0 : i32
    return %arg0, %c0_i32 : i32, i32
  }
}

</mosaic_0001>

<llo_original>
// kernel: value_net_forward.1
$region0: #{value_net_forward.1}
  #allocation0 [shape = 'u32[]', space=smem, size = 0x4, offset = 0x4, fixed_abs, tag = 'smem constant byte address 0x4 - core index']
  #allocation1 [shape = 'u32[72,128]{1,0:T(1,128)}', space=vmem, size = 0x9000, scoped, tag = 'internal scratch']
  #allocation2 [shape = 'f32[1,1]{1,0:T(1,128)S(6)}', space=smem, size = 0x200, scoped, tag = 'scoped memory for value_net_forward.1']
  %s0 = inlined_call_operand.hbm [shape: f32[8,32], index: 0, kind: input, shape index: {}]
  %s1 = inlined_call_operand.hbm [shape: f32[32,128], index: 1, kind: input, shape index: {}]
  %s2 = inlined_call_operand.vmem [shape: f32[1,128], index: 2, kind: input, shape index: {}]
  %s3 = inlined_call_operand.vmem [shape: f32[1,128], index: 3, kind: input, shape index: {}]
  %s4 = inlined_call_operand.<no memory space> [shape: f32[1,1], index: 4, kind: input, shape index: {}]
  %s5 = inlined_call_operand.vmem [shape: f32[8,1], index: 5, kind: output, shape index: {}]
  %s6 = sld [smem:[#allocation0]]
  $region38: #{value_net_forward.1} parent=0
    _
  %s8 = ssub.s32 1, %s6
  %s9 = scalar_select 0, %s8, %s6
  %10 = sst [smem:[#allocation2]] %s4
  $region1: #{value_net_forward.1} parent=0
    #allocation3 [shape = 'u8[4096]{0}', space=vmem, size = 0x1000, scoped, tag = 'input window, operand 0, single buffered']
    #allocation4 [shape = 's32[1]{0}', space=sflag, size = 0x4, scoped, tag = 'scoped memory for value_net_forward.1']
    #allocation5 [shape = 'u8[16384]{0}', space=vmem, size = 0x4000, scoped, tag = 'input window, operand 1, single buffered']
    #allocation6 [shape = 's32[1]{0}', space=sflag, size = 0x4, scoped, tag = 'scoped memory for value_net_forward.1']
    %11 = vsyncpa [#allocation4], 0
    %12 = vsyncpa [#allocation6], 0
    // Predicated region
    $region2: #{value_net_forward.1} parent=1 // pred_check
      _
    $region3: #{value_net_forward.1} parent=1 // pred_check_branch
      %14 = sbr.rel (0) target = $region5
    $region4: #{value_net_forward.1} parent=1 // pred_region
      %16 = vsyncadd [#allocation4], 0
      %s18 = sshll.u32 %s0, 4
      %s19 = int_to_ptr.hbm [resolvable:$true] %s18
      %s20 = sshll.u32 [#allocation3], 4
      %s21 = int_to_ptr.vmem [resolvable:$true] %s20
      %23 = dma.hbm_to_vmem [thread:$0]  %s19, 128, %s21, [#allocation4]
    $region5: #{value_net_forward.1} parent=1 // pred_fallthru
      _
    // Predicated region
    $region6: #{value_net_forward.1} parent=1 // pred_check
      _
    $region7: #{value_net_forward.1} parent=1 // pred_check_branch
      %25 = sbr.rel (0) target = $region9
    $region8: #{value_net_forward.1} parent=1 // pred_region
      %27 = vsyncadd [#allocation6], 0
      %s28 = sshll.u32 %s1, 4
      %s29 = int_to_ptr.hbm [resolvable:$true] %s28
      %s30 = sshll.u32 [#allocation5], 4
      %s31 = int_to_ptr.vmem [resolvable:$true] %s30
      %36 = dma.hbm_to_vmem [thread:$0]  %s29, 512, %s31, [#allocation6], 128, 128, 8
    $region9: #{value_net_forward.1} parent=1 // pred_fallthru
      _
    // Predicated region
    $region10: #{value_net_forward.1} parent=1 // pred_check
      _
    $region11: #{value_net_forward.1} parent=1 // pred_check_branch
      %38 = sbr.rel (0) target = $region13
    $region12: #{value_net_forward.1} parent=1 // pred_region
      _
    $region13: #{value_net_forward.1} parent=1 // pred_fallthru
      _
    // Predicated region
    $region14: #{value_net_forward.1} parent=1 // pred_check
      _
    $region15: #{value_net_forward.1} parent=1 // pred_check_branch
      %40 = sbr.rel (0) target = $region17
    $region16: #{value_net_forward.1} parent=1 // pred_region
      _
    $region17: #{value_net_forward.1} parent=1 // pred_fallthru
      _
    // Predicated region
    $region18: #{value_net_forward.1} parent=1 // pred_check
      _
    $region19: #{value_net_forward.1} parent=1 // pred_check_branch
      %42 = sbr.rel (0) target = $region21
    $region20: #{value_net_forward.1} parent=1 // pred_region
      _
    $region21: #{value_net_forward.1} parent=1 // pred_fallthru
      _
    // Predicated region
    $region22: #{value_net_forward.1} parent=1 // pred_check
      _
    $region23: #{value_net_forward.1} parent=1 // pred_check_branch
      %44 = sbr.rel (0) target = $region25
    $region24: #{value_net_forward.1} parent=1 // pred_region
      %46 = dma.done [#allocation4], 128
    $region25: #{value_net_forward.1} parent=1 // pred_fallthru
      _
    // Predicated region
    $region26: #{value_net_forward.1} parent=1 // pred_check
      _
    $region27: #{value_net_forward.1} parent=1 // pred_check_branch
      %48 = sbr.rel (0) target = $region29
    $region28: #{value_net_forward.1} parent=1 // pred_region
      %50 = dma.done [#allocation6], 512
    $region29: #{value_net_forward.1} parent=1 // pred_fallthru
      _
    %v51 = vld [vmem:[#allocation3] sm:$0xff]
    %v52 = vld [vmem:[#allocation5] sm:$0xff]
    %v53 = vld [vmem:[#allocation5 + $0x8] sm:$0xff]
    %v54 = vld [vmem:[#allocation5 + $0x10] sm:$0xff]
    %v55 = vld [vmem:[#allocation5 + $0x18] sm:$0xff]
    %v56 = vld [vmem:[%s2] sm:$0x1]
    %v58 = vperm.slane %v56, 0
    %vm60 = vcmask 261120
    %v62 = vsel %vm60, %v51, 0
    %64 = vmatpush.msra.mxu0 0.0
    %65 = vmatpush.msra.mxu0 0.0
    %66 = vmatpush.msra.mxu0 0.0
    %67 = vmatpush.msra.mxu0 0.0
    %68 = vmatpush.msra.mxu0 0.0
    %69 = vmatpush.msra.mxu0 0.0
    %70 = vmatpush.msra.mxu0 0.0
    %71 = vmatpush.msra.mxu0 0.0
    %72 = vmatpush.msra.mxu0 0.0
    %73 = vmatpush.msra.mxu0 0.0
    %74 = vmatpush.msra.mxu0 0.0
    %75 = vmatpush.msra.mxu0 0.0
    %76 = vmatpush.msra.mxu0 %v55
    %77 = vmatpush.msra.mxu0 %v54
    %78 = vmatpush.msra.mxu0 %v53
    %79 = vmatpush.msra.mxu0 %v52
    %80 = vmatmul.f32.gmra.mxu0 %v62
    %v81 = vpop.f32.mrf.mxu0
    %v82 = vadd.f32 %v58, %v81
    %83 = vdwg.mxu0
    %v84 = vmax.f32 %v82, 0.0
    %v85 = vld [vmem:[%s3] sm:$0x1]
    %v87 = vperm.slane %v85, 0
    %v89 = vmul.f32 %v84, %v87
    %90 = vadd.xlane.f32.xlu0 %v89
    %v91 = vpop.xlane.xlu0 %90
    %s92 = sld [smem:[#allocation2]]
    %v93 = vstv %s92
    %v94 = vadd.f32 %v91, %v93
    %vm95 = vcmask 7168
    %96 = vst.msk [vmem:[%s5] sm:$0xff] %vm95, %v94
    // Predicated region
    $region30: #{value_net_forward.1} parent=1 // pred_check
      _
    $region31: #{value_net_forward.1} parent=1 // pred_check_branch
      %98 = sbr.rel (0) target = $region33
    $region32: #{value_net_forward.1} parent=1 // pred_region
      _
    $region33: #{value_net_forward.1} parent=1 // pred_fallthru
      _
    // Predicated region
    $region34: #{value_net_forward.1} parent=1 // pred_check
      _
    $region35: #{value_net_forward.1} parent=1 // pred_check_branch
      %100 = sbr.rel (0) target = $region37
    $region36: #{value_net_forward.1} parent=1 // pred_region
      _
    $region37: #{value_net_forward.1} parent=1 // pred_fallthru
      _
    %101 = vsyncpa [#allocation4], 1
    %102 = vsyncpa [#allocation6], 1

</llo_original>
